<compile_context>
chip_gen: v7x
topology: tpu7x:2x2x1
jax: 0.10.0
libtpu: 0.0.40
codegen_flags: <defaults>
</compile_context>

<pallas_src>
import functools

import jax
import jax.numpy as jnp
from jax import lax
from jax.experimental import pallas as pl
from jax.experimental.pallas import tpu as pltpu

QUESTION_NUM = 16
MAX_SEQ = 8

# Batch-tile size.  VMEM per block (double-buffered, f32):
#   2 * TB * S * (Q + 2Q) * 4 B  ~= 3 KiB * TB  -> TB=1024 is ~3 MiB, well under
# the 32 MiB scoped default on v6e/v7x (and v7x's 64 MiB physical VMEM).
_BLOCK_B = 1024


def _loss_kernel(pred_ref, batch_ref, loss_ref, tp_ref, *, q, tb, total_b):
    i = pl.program_id(0)

    p = pred_ref[...].astype(jnp.float32)        # (TB, S, Q)
    bt = batch_ref[...].astype(jnp.float32)      # (TB, S, 2Q)

    c = bt[:, :, :q]                             # correct half
    w = bt[:, :, q:]                             # wrong half
    delta = c + w                                # (TB, S, Q)

    # prob[b, t] = sum_q pred[b, t, q] * delta[b, t+1, q]
    # (diagonal of pred[:, :S-1] @ delta[:, 1:].T fused; VPU mul + lane reduce)
    prob = jnp.sum(p[:, :-1, :] * delta[:, 1:, :], axis=2)      # (TB, S-1)

    # label a = floor(((c - w).sum(-1) + 1) / 2), shifted by one step
    diff = jnp.sum(c - w, axis=2)                               # (TB, S)
    a = jnp.floor((diff[:, 1:] + 1.0) * 0.5)                    # (TB, S-1)

    # BCE per element, torch-style log clamp at -100
    log_p = jnp.maximum(jnp.log(prob), -100.0)
    log_1mp = jnp.maximum(jnp.log(1.0 - prob), -100.0)
    bce = -(a * log_p + (1.0 - a) * log_1mp)                    # (TB, S-1)

    # accuracy numerator: logical_and(prob > 0.5, a)
    tp = jnp.logical_and(prob > 0.5, a != 0.0).astype(jnp.float32)

    # Mask rows of the (possibly partial) last block.  jnp.where selects, so
    # garbage/NaN values in out-of-bounds rows cannot leak into the sums.
    row = lax.broadcasted_iota(jnp.int32, (tb, 1), 0) + i * tb  # (TB, 1)
    valid = row < total_b
    bce = jnp.where(valid, bce, 0.0)
    tp = jnp.where(valid, tp, 0.0)

    loss_part = jnp.sum(bce)
    tp_part = jnp.sum(tp)

    # Lane-dense (1, 8, 128) per-block partials: full unmasked stores, no
    # shared accumulator -> grid axis can be 'parallel' (2 TCs on v7x).
    loss_ref[...] = jnp.broadcast_to(loss_part, loss_ref.shape)
    tp_ref[...] = jnp.broadcast_to(tp_part, tp_ref.shape)


@functools.partial(jax.jit, static_argnames=("question_num", "block_b"))
def loss_func(pred, batch, *, question_num=QUESTION_NUM, block_b=_BLOCK_B):
    """Mirrors lossFunc.forward: returns (loss, acc) as jnp scalars.

    pred:  (B, S, Q)   probabilities in (0, 1)
    batch: (B, S, 2Q)  one-hot interaction encoding (passed unsplit; the kernel
                       slices the correct/wrong halves on the lane axis).
    """
    B, S, _ = batch.shape
    Q = question_num
    TB = min(block_b, B)
    num_blocks = pl.cdiv(B, TB)

    kernel = functools.partial(_loss_kernel, q=Q, tb=TB, total_b=B)

    part_shape = jax.ShapeDtypeStruct((num_blocks, 8, 128), jnp.float32)
    loss_part, tp_part = pl.pallas_call(
        kernel,
        out_shape=(part_shape, part_shape),
        grid_spec=pltpu.PrefetchScalarGridSpec(
            num_scalar_prefetch=0,
            grid=(num_blocks,),
            in_specs=[
                pl.BlockSpec((TB, S, Q), lambda i: (i, 0, 0)),
                pl.BlockSpec((TB, S, 2 * Q), lambda i: (i, 0, 0)),
            ],
            out_specs=(
                pl.BlockSpec((1, 8, 128), lambda i: (i, 0, 0)),
                pl.BlockSpec((1, 8, 128), lambda i: (i, 0, 0)),
            ),
        ),
        compiler_params=pltpu.CompilerParams(
            dimension_semantics=("parallel",),
        ),
    )(pred, batch)

    n = B * (S - 1)
    loss = jnp.sum(loss_part[:, 0, 0]) / n
    acc = jnp.sum(tp_part[:, 0, 0]) / n
    return loss, acc


def _reference(pred, batch, question_num=QUESTION_NUM, max_seq=MAX_SEQ):
    # Pure-JAX reference for a correctness sanity check.
    Q = question_num
    delta = batch[:, :, :Q] + batch[:, :, Q:]
    delta = jnp.transpose(delta[:, 1:, :], (0, 2, 1))
    y = pred[:, : max_seq - 1, :]
    temp = jnp.einsum("btq,bqs->bts", y, delta)
    prob = jnp.diagonal(temp, axis1=1, axis2=2)
    a = jnp.floor(((batch[:, :, :Q] - batch[:, :, Q:]).sum(2) + 1) / 2.0)[:, 1:]
    log_p = jnp.maximum(jnp.log(prob), -100.0)
    log_1mp = jnp.maximum(jnp.log(1.0 - prob), -100.0)
    loss = jnp.mean(-(a * log_p + (1.0 - a) * log_1mp))
    predict = jnp.where(prob > 0.5, 1, 0)
    acc = jnp.logical_and(predict, a).sum() / prob.size
    return loss, acc


if __name__ == "__main__":
    B = 2
    key = jax.random.PRNGKey(0)
    k_q, k_c, k_p = jax.random.split(key, 3)

    # Synthetic one-hot interaction batch: (B, MAX_SEQ, 2*QUESTION_NUM)
    q_idx = jax.random.randint(k_q, (B, MAX_SEQ), 0, QUESTION_NUM)
    correct = jax.random.bernoulli(k_c, 0.5, (B, MAX_SEQ)).astype(jnp.float32)
    onehot = jax.nn.one_hot(q_idx, QUESTION_NUM, dtype=jnp.float32)
    batch = jnp.concatenate(
        [onehot * correct[..., None], onehot * (1.0 - correct[..., None])], axis=-1
    )

    # Predictions in (0, 1), shape (B, MAX_SEQ, QUESTION_NUM)
    pred = jax.nn.sigmoid(
        jax.random.normal(k_p, (B, MAX_SEQ, QUESTION_NUM), jnp.float32)
    )

    loss, acc = loss_func(pred, batch)
    loss, acc = jax.block_until_ready((loss, acc))

    ref_loss, ref_acc = _reference(pred, batch)
    assert jnp.allclose(loss, ref_loss, rtol=1e-5, atol=1e-6), (loss, ref_loss)
    assert jnp.allclose(acc, ref_acc, rtol=1e-5, atol=1e-6), (acc, ref_acc)

    print("KERNEL_OK")
</pallas_src>

<mosaic_0001>
module attributes {stable_mosaic.version = 11 : i64} {
  func.func @_loss_kernel(%arg0: i32, %arg1: memref<2x8x16xf32, #tpu.memory_space<vmem>>, %arg2: memref<2x8x32xf32, #tpu.memory_space<vmem>>, %arg3: memref<1x8x128xf32, #tpu.memory_space<vmem>>, %arg4: memref<1x8x128xf32, #tpu.memory_space<vmem>>) attributes {dimension_semantics = [#tpu.dimension_semantics<parallel>], iteration_bounds = array<i64: 1>, scalar_prefetch = 0 : i64, scratch_operands = 0 : i64, tpu.core_type = #tpu.core_type<tc>, window_params = [{transform_indices = @transform_0, window_bounds = array<i64: 2, 8, 16>}, {transform_indices = @transform_1, window_bounds = array<i64: 2, 8, 32>}, {transform_indices = @transform_2, window_bounds = array<i64: 1, 8, 128>}, {transform_indices = @transform_3, window_bounds = array<i64: 1, 8, 128>}]} {
    %c0 = arith.constant 0 : index
    %c0_0 = arith.constant 0 : index
    %c0_1 = arith.constant 0 : index
    %0 = vector.load %arg1[%c0, %c0_0, %c0_1] : memref<2x8x16xf32, #tpu.memory_space<vmem>>, vector<2x8x16xf32>
    %c0_2 = arith.constant 0 : index
    %c0_3 = arith.constant 0 : index
    %c0_4 = arith.constant 0 : index
    %1 = vector.load %arg2[%c0_2, %c0_3, %c0_4] : memref<2x8x32xf32, #tpu.memory_space<vmem>>, vector<2x8x32xf32>
    %2 = vector.extract_strided_slice %1 {offsets = [0, 0, 0], sizes = [2, 8, 16], strides = [1, 1, 1]} : vector<2x8x32xf32> to vector<2x8x16xf32>
    %3 = vector.extract_strided_slice %1 {offsets = [0, 0, 16], sizes = [2, 8, 16], strides = [1, 1, 1]} : vector<2x8x32xf32> to vector<2x8x16xf32>
    %4 = arith.addf %2, %3 : vector<2x8x16xf32>
    %5 = vector.extract_strided_slice %0 {offsets = [0, 0, 0], sizes = [2, 7, 16], strides = [1, 1, 1]} : vector<2x8x16xf32> to vector<2x7x16xf32>
    %6 = vector.extract_strided_slice %4 {offsets = [0, 1, 0], sizes = [2, 7, 16], strides = [1, 1, 1]} : vector<2x8x16xf32> to vector<2x7x16xf32>
    %7 = arith.mulf %5, %6 : vector<2x7x16xf32>
    %cst = arith.constant dense<0.000000e+00> : vector<2x7xf32>
    %8 = vector.multi_reduction <add>, %7, %cst [2] : vector<2x7x16xf32> to vector<2x7xf32>
    %9 = arith.subf %2, %3 : vector<2x8x16xf32>
    %cst_5 = arith.constant dense<0.000000e+00> : vector<2x8xf32>
    %10 = vector.multi_reduction <add>, %9, %cst_5 [2] : vector<2x8x16xf32> to vector<2x8xf32>
    %11 = vector.extract_strided_slice %10 {offsets = [0, 1], sizes = [2, 7], strides = [1, 1]} : vector<2x8xf32> to vector<2x7xf32>
    %cst_6 = arith.constant 1.000000e+00 : f32
    %12 = vector.broadcast %cst_6 : f32 to vector<2x7xf32>
    %13 = arith.addf %11, %12 : vector<2x7xf32>
    %cst_7 = arith.constant 5.000000e-01 : f32
    %14 = vector.broadcast %cst_7 : f32 to vector<2x7xf32>
    %15 = arith.mulf %13, %14 : vector<2x7xf32>
    %16 = math.floor %15 : vector<2x7xf32>
    %17 = math.log %8 : vector<2x7xf32>
    %cst_8 = arith.constant -1.000000e+02 : f32
    %18 = vector.broadcast %cst_8 : f32 to vector<2x7xf32>
    %19 = arith.maximumf %17, %18 : vector<2x7xf32>
    %cst_9 = arith.constant 1.000000e+00 : f32
    %20 = vector.broadcast %cst_9 : f32 to vector<2x7xf32>
    %21 = arith.subf %20, %8 : vector<2x7xf32>
    %22 = math.log %21 : vector<2x7xf32>
    %cst_10 = arith.constant -1.000000e+02 : f32
    %23 = vector.broadcast %cst_10 : f32 to vector<2x7xf32>
    %24 = arith.maximumf %22, %23 : vector<2x7xf32>
    %25 = arith.mulf %16, %19 : vector<2x7xf32>
    %cst_11 = arith.constant 1.000000e+00 : f32
    %26 = vector.broadcast %cst_11 : f32 to vector<2x7xf32>
    %27 = arith.subf %26, %16 : vector<2x7xf32>
    %28 = arith.mulf %27, %24 : vector<2x7xf32>
    %29 = arith.addf %25, %28 : vector<2x7xf32>
    %cst_12 = arith.constant 0.000000e+00 : f32
    %30 = vector.broadcast %cst_12 : f32 to vector<2x7xf32>
    %31 = arith.subf %30, %29 : vector<2x7xf32>
    %cst_13 = arith.constant 5.000000e-01 : f32
    %32 = vector.broadcast %cst_13 : f32 to vector<2x7xf32>
    %33 = arith.cmpf ogt, %8, %32 : vector<2x7xf32>
    %cst_14 = arith.constant 0.000000e+00 : f32
    %34 = vector.broadcast %cst_14 : f32 to vector<2x7xf32>
    %35 = arith.cmpf one, %16, %34 : vector<2x7xf32>
    %36 = arith.andi %33, %35 : vector<2x7xi1>
    %37 = arith.extui %36 : vector<2x7xi1> to vector<2x7xi32>
    %38 = arith.sitofp %37 : vector<2x7xi32> to vector<2x7xf32>
    %39 = tpu.iota {dimensions = array<i32: 0>} : vector<2x1xi32>
    %c2_i32 = arith.constant 2 : i32
    %40 = arith.muli %arg0, %c2_i32 : i32
    %41 = vector.broadcast %40 : i32 to vector<2x1xi32>
    %42 = arith.addi %39, %41 : vector<2x1xi32>
    %c2_i32_15 = arith.constant 2 : i32
    %43 = vector.broadcast %c2_i32_15 : i32 to vector<2x1xi32>
    %44 = arith.cmpi slt, %42, %43 : vector<2x1xi32>
    %cst_16 = arith.constant 0.000000e+00 : f32
    %45 = vector.shape_cast %44 : vector<2x1xi1> to vector<2x1xi1>
    %46 = vector.broadcast %45 : vector<2x1xi1> to vector<2x7xi1>
    %47 = vector.broadcast %cst_16 : f32 to vector<2x7xf32>
    %48 = arith.select %46, %31, %47 : vector<2x7xi1>, vector<2x7xf32>
    %cst_17 = arith.constant 0.000000e+00 : f32
    %49 = vector.shape_cast %44 : vector<2x1xi1> to vector<2x1xi1>
    %50 = vector.broadcast %49 : vector<2x1xi1> to vector<2x7xi1>
    %51 = vector.broadcast %cst_17 : f32 to vector<2x7xf32>
    %52 = arith.select %50, %38, %51 : vector<2x7xi1>, vector<2x7xf32>
    %53 = vector.shape_cast %48 : vector<2x7xf32> to vector<1x2x7xf32>
    %cst_18 = arith.constant dense<0.000000e+00> : vector<1xf32>
    %54 = vector.multi_reduction <add>, %53, %cst_18 [1, 2] : vector<1x2x7xf32> to vector<1xf32>
    %55 = vector.shape_cast %54 : vector<1xf32> to vector<1x1x1xf32>
    %56 = vector.extract %55[0, 0, 0] : f32 from vector<1x1x1xf32>
    %57 = vector.shape_cast %52 : vector<2x7xf32> to vector<1x2x7xf32>
    %cst_19 = arith.constant dense<0.000000e+00> : vector<1xf32>
    %58 = vector.multi_reduction <add>, %57, %cst_19 [1, 2] : vector<1x2x7xf32> to vector<1xf32>
    %59 = vector.shape_cast %58 : vector<1xf32> to vector<1x1x1xf32>
    %60 = vector.extract %59[0, 0, 0] : f32 from vector<1x1x1xf32>
    %61 = vector.broadcast %56 : f32 to vector<1x8x128xf32>
    %c0_20 = arith.constant 0 : index
    %c0_21 = arith.constant 0 : index
    %c0_22 = arith.constant 0 : index
    %62 = vector.load %arg3[%c0_20, %c0_21, %c0_22] : memref<1x8x128xf32, #tpu.memory_space<vmem>>, vector<1x8x128xf32>
    tpu.vector_store %arg3[%c0_20, %c0_21, %c0_22], %61 {strides = array<i32>} : memref<1x8x128xf32, #tpu.memory_space<vmem>>, vector<1x8x128xf32>,
    %63 = vector.broadcast %60 : f32 to vector<1x8x128xf32>
    %c0_23 = arith.constant 0 : index
    %c0_24 = arith.constant 0 : index
    %c0_25 = arith.constant 0 : index
    %64 = vector.load %arg4[%c0_23, %c0_24, %c0_25] : memref<1x8x128xf32, #tpu.memory_space<vmem>>, vector<1x8x128xf32>
    tpu.vector_store %arg4[%c0_23, %c0_24, %c0_25], %63 {strides = array<i32>} : memref<1x8x128xf32, #tpu.memory_space<vmem>>, vector<1x8x128xf32>,
    return
  }
  func.func @transform_0(%arg0: i32) -> (i32, i32, i32) {
    %c0_i32 = arith.constant 0 : i32
    %c0_i32_0 = arith.constant 0 : i32
    %c0_i32_1 = arith.constant 0 : i32
    return %arg0, %c0_i32, %c0_i32_0 : i32, i32, i32
  }
  func.func @transform_1(%arg0: i32) -> (i32, i32, i32) {
    %c0_i32 = arith.constant 0 : i32
    %c0_i32_0 = arith.constant 0 : i32
    %c0_i32_1 = arith.constant 0 : i32
    return %arg0, %c0_i32, %c0_i32_0 : i32, i32, i32
  }
  func.func @transform_2(%arg0: i32) -> (i32, i32, i32) {
    %c0_i32 = arith.constant 0 : i32
    %c0_i32_0 = arith.constant 0 : i32
    %c0_i32_1 = arith.constant 0 : i32
    return %arg0, %c0_i32, %c0_i32_0 : i32, i32, i32
  }
  func.func @transform_3(%arg0: i32) -> (i32, i32, i32) {
    %c0_i32 = arith.constant 0 : i32
    %c0_i32_0 = arith.constant 0 : i32
    %c0_i32_1 = arith.constant 0 : i32
    return %arg0, %c0_i32, %c0_i32_0 : i32, i32, i32
  }
}

</mosaic_0001>

<llo_original>
// kernel: loss_func.1
$region0: #{loss_func.1}
  #allocation0 [shape = 'u32[]', space=smem, size = 0x4, offset = 0x4, fixed_abs, tag = 'smem constant byte address 0x4 - core index']
  #allocation1 [shape = 'u32[144,128]{1,0:T(1,128)}', space=vmem, size = 0x12000, scoped, tag = 'internal scratch']
  %s0 = inlined_call_operand.hbm [shape: f32[2,8,16], index: 0, kind: input, shape index: {}]
  %s1 = inlined_call_operand.hbm [shape: f32[2,8,32], index: 1, kind: input, shape index: {}]
  %s2 = inlined_call_operand.vmem [shape: f32[1,8,128], index: 2, kind: output, shape index: {0}]
  %s3 = inlined_call_operand.vmem [shape: f32[1,8,128], index: 3, kind: output, shape index: {1}]
  %4 = xla_tuple %s2, %s3
  %s5 = sld [smem:[#allocation0]]
  $region34: #{loss_func.1} parent=0
    _
  %s7 = ssub.s32 1, %s5
  %s8 = scalar_select 0, %s7, %s5
  $region1: #{loss_func.1} parent=0
    #allocation2 [shape = 'u8[8192]{0}', space=vmem, size = 0x2000, scoped, tag = 'input window, operand 0, single buffered']
    #allocation3 [shape = 's32[1]{0}', space=sflag, size = 0x4, scoped, tag = 'scoped memory for loss_func.1']
    #allocation4 [shape = 'u8[8192]{0}', space=vmem, size = 0x2000, scoped, tag = 'input window, operand 1, single buffered']
    #allocation5 [shape = 's32[1]{0}', space=sflag, size = 0x4, scoped, tag = 'scoped memory for loss_func.1']
    %9 = vsyncpa [#allocation3], 0
    %10 = vsyncpa [#allocation5], 0
    // Predicated region
    $region2: #{loss_func.1} parent=1 // pred_check
      _
    $region3: #{loss_func.1} parent=1 // pred_check_branch
      %12 = sbr.rel (0) target = $region5
    $region4: #{loss_func.1} parent=1 // pred_region
      %s14 = ssub.s32 256, 256
      %15 = vsyncadd [#allocation3], %s14
      %s16 = sshll.u32 [#allocation2], 4
      %s17 = int_to_ptr.vmem [resolvable:$true] %s16
      %22 = dma.hbm_to_vmem [thread:$0]  %s0, 256, %s17, [#allocation3], 128, 128, 8
    $region5: #{loss_func.1} parent=1 // pred_fallthru
      _
    // Predicated region
    $region6: #{loss_func.1} parent=1 // pred_check
      _
    $region7: #{loss_func.1} parent=1 // pred_check_branch
      %24 = sbr.rel (0) target = $region9
    $region8: #{loss_func.1} parent=1 // pred_region
      %s26 = ssub.s32 256, 256
      %27 = vsyncadd [#allocation5], %s26
      %s28 = sshll.u32 [#allocation4], 4
      %s29 = int_to_ptr.vmem [resolvable:$true] %s28
      %34 = dma.hbm_to_vmem [thread:$0]  %s1, 256, %s29, [#allocation5], 128, 128, 8
    $region9: #{loss_func.1} parent=1 // pred_fallthru
      _
    // Predicated region
    $region10: #{loss_func.1} parent=1 // pred_check
      _
    $region11: #{loss_func.1} parent=1 // pred_check_branch
      %36 = sbr.rel (0) target = $region13
    $region12: #{loss_func.1} parent=1 // pred_region
      %37 = dma.done [#allocation3], 256
    $region13: #{loss_func.1} parent=1 // pred_fallthru
      _
    // Predicated region
    $region14: #{loss_func.1} parent=1 // pred_check
      _
    $region15: #{loss_func.1} parent=1 // pred_check_branch
      %39 = sbr.rel (0) target = $region17
    $region16: #{loss_func.1} parent=1 // pred_region
      %40 = dma.done [#allocation5], 256
    $region17: #{loss_func.1} parent=1 // pred_fallthru
      _
    %v41 = vld [vmem:[#allocation2] sm:$0xff]
    %v42 = vld [vmem:[#allocation2 + $0x8] sm:$0xff]
    %v43 = vld [vmem:[#allocation4] sm:$0xff]
    %v44 = vld [vmem:[#allocation4 + $0x8] sm:$0xff]
    %47 = vrot.lane.b32.xlu0 %v43, 112
    %v48 = vpop.permute.xlu0 %47
    %49 = vrot.lane.b32.xlu0 %v44, 112
    %v50 = vpop.permute.xlu0 %49
    %v53 = vadd.f32 %v43, %v48
    %v54 = vadd.f32 %v44, %v50
    %v57 = vrot.slane %v53, 1
    %v58 = vrot.slane %v54, 1
    %v61 = vmul.f32 %v41, %v57
    %v62 = vmul.f32 %v42, %v58
    %vm63 = vcmask 129024
    %v64 = vsel %vm63, %v61, 0.0
    %65 = vadd.xlane.f32.xlu0 %v64
    %v66 = vpop.xlane.xlu0 %65
    %v67 = vsel %vm63, %v62, 0.0
    %68 = vadd.xlane.f32.xlu0 %v67
    %v69 = vpop.xlane.xlu0 %68
    %v70 = vsub.f32 %v43, %v48
    %v71 = vsub.f32 %v44, %v50
    %vm72 = vcmask 130048
    %v73 = vsel %vm72, %v70, 0.0
    %74 = vadd.xlane.f32.xlu0 %v73
    %v75 = vpop.xlane.xlu0 %74
    %v76 = vsel %vm72, %v71, 0.0
    %77 = vadd.xlane.f32.xlu0 %v76
    %v78 = vpop.xlane.xlu0 %77
    %v79 = vadd.f32 %v75, 1.0
    %v80 = vadd.f32 %v78, 1.0
    %v81 = vmul.f32 %v79, 0.5
    %v82 = vmul.f32 %v80, 0.5
    %v83 = vfloor.f32 %v81
    %v84 = vfloor.f32 %v82
    %v85 = vlog2.pop %v66
    %v86 = vmul.f32 %v85, 0.6931472
    %v87 = vlog2.pop %v69
    %v88 = vmul.f32 %v87, 0.6931472
    %v89 = vmax.f32 %v86, -100.0
    %v90 = vmax.f32 %v88, -100.0
    %v91 = vsub.f32 1.0, %v66
    %v92 = vsub.f32 1.0, %v69
    %v93 = vlog2.pop %v91
    %v94 = vmul.f32 %v93, 0.6931472
    %v95 = vlog2.pop %v92
    %v96 = vmul.f32 %v95, 0.6931472
    %v97 = vmax.f32 %v94, -100.0
    %v98 = vmax.f32 %v96, -100.0
    %v101 = vrot.slane %v89, 7
    %v102 = vrot.slane %v90, 7
    %v105 = vmul.f32 %v83, %v101
    %v106 = vmul.f32 %v84, %v102
    %v107 = vsub.f32 1.0, %v83
    %v108 = vsub.f32 1.0, %v84
    %v111 = vrot.slane %v97, 7
    %v112 = vrot.slane %v98, 7
    %v115 = vmul.f32 %v107, %v111
    %v116 = vmul.f32 %v108, %v112
    %v117 = vadd.f32 %v105, %v115
    %v118 = vadd.f32 %v106, %v116
    %v119 = vsub.f32 0.0, %v117
    %v120 = vsub.f32 0.0, %v118
    %vm121 = vcmp.gt.f32.partialorder %v66, 0.5
    %vm122 = vcmp.gt.f32.partialorder %v69, 0.5
    %vm123 = vcmp.ne.f32.partialorder %v83, 0.0
    %vm124 = vcmp.ne.f32.partialorder %v84, 0.0
    %v125 = vsel %vm123, 1, 0
    %v126 = vsel %vm124, 1, 0
    %v127 = vrot.slane %v125, 1
    %v128 = vrot.slane %v126, 1
    %vm129 = vcmp.ne.s32.totalorder %v127, 0
    %vm130 = vcmp.ne.s32.totalorder %v128, 0
    %vm131 = vmand %vm121, %vm129
    %vm132 = vmand %vm122, %vm130
    %v133 = vsel %vm131, 1, 0
    %v134 = vsel %vm132, 1, 0
    %v135 = vcvt.s32.f32 %v133
    %v136 = vcvt.s32.f32 %v134
    %v137 = vlaneseq
    %v138 = vshrl.u32 %v137, 7
    %s139 = smul.u32 0, 2
    %v140 = vstv %s139
    %v141 = vadd.s32 %v138, %v140
    %vm142 = vcmp.lt.s32.totalorder %v141, 2
    %v143 = vsel %vm142, 1, 0
    %vm144 = vcmp.eq.s32.totalorder %v143, 1
    %147 = vset.pattern.permute.xlu0 0
    %148 = vperm.xlu0 %147, %v119
    %v149 = vpop.permute.xlu0 %148
    %150 = vset.pattern.permute.xlu0 0
    %151 = vperm.xlu0 %150, %v120
    %v152 = vpop.permute.xlu0 %151
    %v153 = vlaneseq
    %v154 = vand.u32 %v153, 127
    %v155 = vadd.s32 %v154, 1
    %v156 = vlaneseq
    %v157 = vshrl.u32 %v156, 7
    %v158 = vsub.s32 %v155, %v157
    %v159 = vrot.slane %v149, %v158
    %v160 = vlaneseq
    %v161 = vshrl.u32 %v160, 7
    %v162 = vsub.s32 %v155, %v161
    %v163 = vrot.slane %v152, %v162
    %vm164 = vcmask 1041409
    %v165 = vsel %vm164, %v163, %v159
    %v167 = vsel %vm144, %v165, 0.0
    %170 = vset.pattern.permute.xlu0 0
    %171 = vperm.xlu0 %170, %v135
    %v172 = vpop.permute.xlu0 %171
    %173 = vset.pattern.permute.xlu0 0
    %174 = vperm.xlu0 %173, %v136
    %v175 = vpop.permute.xlu0 %174
    %v176 = vlaneseq
    %v177 = vshrl.u32 %v176, 7
    %v178 = vsub.s32 %v154, %v177
    %v179 = vrot.slane %v172, %v178
    %v180 = vlaneseq
    %v181 = vshrl.u32 %v180, 7
    %v182 = vsub.s32 %v154, %v181
    %v183 = vrot.slane %v175, %v182
    %v184 = vsel %vm164, %v183, %v179
    %v186 = vsel %vm144, %v184, 0.0
    %vm187 = vcmask 50176
    %v188 = vsel %vm187, %v167, 0.0
    %189 = vadd.xlane.f32.xlu0 %v188
    %v190 = vpop.xlane.xlu0 %189
    %v191 = vrot.slane %v190, 4
    %v192 = vadd.f32 %v190, %v191
    %v193 = vrot.slane %v192, 2
    %v194 = vadd.f32 %v192, %v193
    %v195 = vrot.slane %v194, 1
    %v196 = vadd.f32 %v194, %v195
    %s197 = vtos %v196
    %v198 = vsel %vm187, %v186, 0.0
    %199 = vadd.xlane.f32.xlu0 %v198
    %v200 = vpop.xlane.xlu0 %199
    %v201 = vrot.slane %v200, 4
    %v202 = vadd.f32 %v200, %v201
    %v203 = vrot.slane %v202, 2
    %v204 = vadd.f32 %v202, %v203
    %v205 = vrot.slane %v204, 1
    %v206 = vadd.f32 %v204, %v205
    %s207 = vtos %v206
    %v208 = vstv %s197
    %209 = vst [vmem:[%s2] sm:$0xff] %v208
    %v210 = vstv %s207
    %211 = vst [vmem:[%s3] sm:$0xff] %v210
    // Predicated region
    $region18: #{loss_func.1} parent=1 // pred_check
      _
    $region19: #{loss_func.1} parent=1 // pred_check_branch
      %213 = sbr.rel (0) target = $region21
    $region20: #{loss_func.1} parent=1 // pred_region
      _
    $region21: #{loss_func.1} parent=1 // pred_fallthru
      _
    // Predicated region
    $region22: #{loss_func.1} parent=1 // pred_check
      _
    $region23: #{loss_func.1} parent=1 // pred_check_branch
      %215 = sbr.rel (0) target = $region25
    $region24: #{loss_func.1} parent=1 // pred_region
      _
    $region25: #{loss_func.1} parent=1 // pred_fallthru
      _
    // Predicated region
    $region26: #{loss_func.1} parent=1 // pred_check
      _
    $region27: #{loss_func.1} parent=1 // pred_check_branch
      %217 = sbr.rel (0) target = $region29
    $region28: #{loss_func.1} parent=1 // pred_region
      _
    $region29: #{loss_func.1} parent=1 // pred_fallthru
      _
    // Predicated region
    $region30: #{loss_func.1} parent=1 // pred_check
      _
    $region31: #{loss_func.1} parent=1 // pred_check_branch
      %219 = sbr.rel (0) target = $region33
    $region32: #{loss_func.1} parent=1 // pred_region
      _
    $region33: #{loss_func.1} parent=1 // pred_fallthru
      _
    %220 = vsyncpa [#allocation3], 1
    %221 = vsyncpa [#allocation5], 1

</llo_original>
